<compile_context>
chip_gen: v6e
topology: v6e:2x2x1
jax: 0.10.0
libtpu: 0.0.40
codegen_flags: <defaults>
</compile_context>

<pallas_src>
import jax
import jax.numpy as jnp
from jax.experimental import pallas as pl
from jax.experimental.pallas import tpu as pltpu


_DMA_RING = 8  # max outstanding HBM->HBM channel copies


def _shuffle_dma_kernel(idx_ref, x_hbm, o_hbm, sems):
    """Permute dim=1: one direct HBM->HBM DMA per output channel.

    idx_ref : SMEM int32[C]    (scalar-prefetched permutation)
    x_hbm   : HBM  [B, C, S]   (raw ref, memory_space=pl.ANY)
    o_hbm   : HBM  [B, C, S]   (raw ref, memory_space=pl.ANY)
    sems    : DMA semaphores [K] (ring)
    """
    C = o_hbm.shape[1]
    K = sems.shape[0]

    def channel_copy(c, slot):
        # Output channel c is fed from input channel idx[c]: a (B, 1, S) slab
        # = B rows of S contiguous elements -> rectangular strided DMA that the
        # DMA engines handle natively, never touching VMEM or the VPU.
        return pltpu.make_async_copy(
            x_hbm.at[:, pl.ds(idx_ref[c], 1), :],
            o_hbm.at[:, pl.ds(c, 1), :],
            sems.at[slot],
        )

    @pl.loop(0, C)
    def _(c):
        slot = c % K

        @pl.when(c >= K)
        def _():
            # Lazily retire the copy issued K iterations ago in this slot,
            # keeping up to K transfers in flight.
            channel_copy(c - K, slot).wait()

        channel_copy(c, slot).start()

    # Drain the copies still in flight.
    @pl.loop(max(C - K, 0), C)
    def _(c):
        channel_copy(c, c % K).wait()


def invertible_shuffle_forward(x, shuffle_indices):
    """Pallas implementation of InvertibleShuffle.forward (permute dim=1)."""
    assert x.ndim >= 2, "need at least (batch, channel) dims"
    B, C = int(x.shape[0]), int(x.shape[1])
    S = 1
    for d in x.shape[2:]:
        S *= int(d)

    # Merging the trailing (spatial) dims is a layout-preserving reshape of the
    # minor-most dims (bitcast-level, no HBM pass) — NOT a transpose.
    xs = x.reshape(B, C, S)
    idx = shuffle_indices.astype(jnp.int32)
    ring = min(_DMA_RING, C)
    nbytes = x.size * jnp.dtype(x.dtype).itemsize

    out = pl.pallas_call(
        _shuffle_dma_kernel,
        out_shape=jax.ShapeDtypeStruct((B, C, S), x.dtype),
        grid_spec=pltpu.PrefetchScalarGridSpec(
            num_scalar_prefetch=1,                          # indices -> SMEM
            grid=(1,),                                      # single step; DMA loop inside
            in_specs=[pl.BlockSpec(memory_space=pl.ANY)],   # raw HBM input ref
            out_specs=pl.BlockSpec(memory_space=pl.ANY),    # raw HBM output ref
            scratch_shapes=[pltpu.SemaphoreType.DMA((ring,))],
        ),
        compiler_params=pltpu.CompilerParams(
            dimension_semantics=("arbitrary",),
        ),
        cost_estimate=pl.CostEstimate(
            flops=0, transcendentals=0, bytes_accessed=2 * nbytes),
    )(idx, xs)

    # Splitting the minor dim back out is also a bitcast-level reshape.
    return out.reshape(x.shape)


def make_unshuffle_indices(shuffle_indices):
    """Static inverse permutation (mirrors the PyTorch unshuffle_indices buffer);
    computed once per module, hoisted out of the per-call path."""
    return jnp.argsort(jnp.asarray(shuffle_indices)).astype(jnp.int32)


def invertible_shuffle_invert(y, unshuffle_indices):
    """InvertibleShuffle.invert: same kernel, precomputed inverse permutation."""
    return invertible_shuffle_forward(y, unshuffle_indices)


if __name__ == "__main__":
    key = jax.random.PRNGKey(0)

    # Small shapes consistent with the module: batch=2, channels=4, 16x16 spatial.
    B, C, H, W = 2, 4, 16, 16
    x = jax.random.normal(key, (B, C, H, W), jnp.float32)

    # Deterministic shuffling order over the channel dim.
    shuffling_order = [2, 0, 3, 1]
    shuffle_indices = jnp.asarray(shuffling_order, dtype=jnp.int32)
    unshuffle_indices = make_unshuffle_indices(shuffle_indices)  # once, like the buffer

    # forward: y = index_select(x, dim=1, shuffle_indices)
    y = jax.block_until_ready(invertible_shuffle_forward(x, shuffle_indices))
    ref = jnp.take(x, shuffle_indices, axis=1)
    assert jnp.array_equal(y, ref), "forward mismatch vs index_select reference"

    # invert(forward(x)) == x  (exact: pure permutation, no arithmetic)
    x_rec = jax.block_until_ready(invertible_shuffle_invert(y, unshuffle_indices))
    assert jnp.array_equal(x_rec, x), "invert(forward(x)) != x"

    print("KERNEL_OK")
</pallas_src>

<mosaic_0001>
module attributes {stable_mosaic.version = 11 : i64} {
  func.func @_shuffle_dma_kernel(%arg0: i32, %arg1: memref<4xi32, #tpu.memory_space<smem>>, %arg2: memref<2x4x256xf32, #tpu.memory_space<any>>, %arg3: memref<2x4x256xf32, #tpu.memory_space<any>>, %arg4: memref<4x!tpu.dma_semaphore, #tpu.memory_space<semaphore_mem>>) attributes {dimension_semantics = [#tpu.dimension_semantics<arbitrary>], iteration_bounds = array<i64: 1>, scalar_prefetch = 1 : i64, scratch_operands = 1 : i64, tpu.core_type = #tpu.core_type<tc>, window_params = [{}, {}]} {
    %c0_i32 = arith.constant 0 : i32
    %c4_i32 = arith.constant 4 : i32
    %0 = arith.addi %c0_i32, %c4_i32 : i32
    %c1_i32 = arith.constant 1 : i32
    scf.for %arg5 = %c0_i32 to %0 step %c1_i32  : i32 {
      %c1_i32_5 = arith.constant 1 : i32
      %2 = arith.muli %arg5, %c1_i32_5 : i32
      %c0_i32_6 = arith.constant 0 : i32
      %3 = arith.addi %c0_i32_6, %2 : i32
      %c4_i32_7 = arith.constant 4 : i32
      %c0_i32_8 = arith.constant 0 : i32
      %4 = arith.cmpi eq, %c4_i32_7, %c0_i32_8 : i32
      %c1_i32_9 = arith.constant 1 : i32
      %5 = arith.select %4, %c1_i32_9, %c4_i32_7 : i32
      %6 = arith.remsi %3, %5 : i32
      %c0_i32_10 = arith.constant 0 : i32
      %7 = arith.cmpi ne, %6, %c0_i32_10 : i32
      %c0_i32_11 = arith.constant 0 : i32
      %8 = arith.cmpi slt, %6, %c0_i32_11 : i32
      %c0_i32_12 = arith.constant 0 : i32
      %9 = arith.cmpi slt, %5, %c0_i32_12 : i32
      %10 = arith.xori %8, %9 : i1
      %11 = arith.andi %10, %7 : i1
      %12 = arith.addi %6, %5 : i32
      %13 = arith.select %11, %12, %6 : i32
      %c4_i32_13 = arith.constant 4 : i32
      %14 = arith.cmpi sge, %3, %c4_i32_13 : i32
      %15 = arith.extui %14 : i1 to i32
      %c0_i32_14 = arith.constant 0 : i32
      %16 = arith.cmpi ne, %15, %c0_i32_14 : i32
      scf.if %16 {
        %c4_i32_19 = arith.constant 4 : i32
        %23 = arith.subi %3, %c4_i32_19 : i32
        %24 = arith.index_cast %23 : i32 to index
        %25 = memref.load %arg1[%24] : memref<4xi32, #tpu.memory_space<smem>>
        %c0_i32_20 = arith.constant 0 : i32
        %c0_i32_21 = arith.constant 0 : i32
        %26 = tpu.memref_slice %arg2[%c0_i32_20, %25, %c0_i32_21] : memref<2x4x256xf32, #tpu.memory_space<any>> -> memref<2x1x256xf32, #tpu.memory_space<any>>
        %c0_i32_22 = arith.constant 0 : i32
        %c0_i32_23 = arith.constant 0 : i32
        %27 = tpu.memref_slice %arg3[%c0_i32_22, %23, %c0_i32_23] : memref<2x4x256xf32, #tpu.memory_space<any>> -> memref<2x1x256xf32, #tpu.memory_space<any>>
        %28 = tpu.memref_slice %arg4[%13] : memref<4x!tpu.dma_semaphore, #tpu.memory_space<semaphore_mem>> -> memref<1x!tpu.dma_semaphore, #tpu.memory_space<semaphore_mem>>
        %29 = tpu.memref_squeeze %28 : memref<1x!tpu.dma_semaphore, #tpu.memory_space<semaphore_mem>> -> memref<!tpu.dma_semaphore, #tpu.memory_space<semaphore_mem>>
        tpu.wait_dma2 semaphore(%29 : memref<!tpu.dma_semaphore, #tpu.memory_space<semaphore_mem>>) src(%26 : memref<2x1x256xf32, #tpu.memory_space<any>>) dst(%27 : memref<2x1x256xf32, #tpu.memory_space<any>>)
      } else {
      }
      %17 = arith.index_cast %3 : i32 to index
      %18 = memref.load %arg1[%17] : memref<4xi32, #tpu.memory_space<smem>>
      %c0_i32_15 = arith.constant 0 : i32
      %c0_i32_16 = arith.constant 0 : i32
      %19 = tpu.memref_slice %arg2[%c0_i32_15, %18, %c0_i32_16] : memref<2x4x256xf32, #tpu.memory_space<any>> -> memref<2x1x256xf32, #tpu.memory_space<any>>
      %c0_i32_17 = arith.constant 0 : i32
      %c0_i32_18 = arith.constant 0 : i32
      %20 = tpu.memref_slice %arg3[%c0_i32_17, %3, %c0_i32_18] : memref<2x4x256xf32, #tpu.memory_space<any>> -> memref<2x1x256xf32, #tpu.memory_space<any>>
      %21 = tpu.memref_slice %arg4[%13] : memref<4x!tpu.dma_semaphore, #tpu.memory_space<semaphore_mem>> -> memref<1x!tpu.dma_semaphore, #tpu.memory_space<semaphore_mem>>
      %22 = tpu.memref_squeeze %21 : memref<1x!tpu.dma_semaphore, #tpu.memory_space<semaphore_mem>> -> memref<!tpu.dma_semaphore, #tpu.memory_space<semaphore_mem>>
      tpu.enqueue_dma source(%19 : memref<2x1x256xf32, #tpu.memory_space<any>>) target(%20 : memref<2x1x256xf32, #tpu.memory_space<any>>) target_semaphore(%22 : memref<!tpu.dma_semaphore, #tpu.memory_space<semaphore_mem>>)
    }
    %c4_i32_0 = arith.constant 4 : i32
    %c0_i32_1 = arith.constant 0 : i32
    %c4_i32_2 = arith.constant 4 : i32
    %1 = arith.addi %c0_i32_1, %c4_i32_2 : i32
    %c1_i32_3 = arith.constant 1 : i32
    scf.for %arg5 = %c0_i32_1 to %1 step %c1_i32_3  : i32 {
      %c1_i32_5 = arith.constant 1 : i32
      %2 = arith.muli %arg5, %c1_i32_5 : i32
      %c0_i32_6 = arith.constant 0 : i32
      %3 = arith.addi %c0_i32_6, %2 : i32
      %c4_i32_7 = arith.constant 4 : i32
      %c0_i32_8 = arith.constant 0 : i32
      %4 = arith.cmpi eq, %c4_i32_7, %c0_i32_8 : i32
      %c1_i32_9 = arith.constant 1 : i32
      %5 = arith.select %4, %c1_i32_9, %c4_i32_7 : i32
      %6 = arith.remsi %3, %5 : i32
      %c0_i32_10 = arith.constant 0 : i32
      %7 = arith.cmpi ne, %6, %c0_i32_10 : i32
      %c0_i32_11 = arith.constant 0 : i32
      %8 = arith.cmpi slt, %6, %c0_i32_11 : i32
      %c0_i32_12 = arith.constant 0 : i32
      %9 = arith.cmpi slt, %5, %c0_i32_12 : i32
      %10 = arith.xori %8, %9 : i1
      %11 = arith.andi %10, %7 : i1
      %12 = arith.addi %6, %5 : i32
      %13 = arith.select %11, %12, %6 : i32
      %14 = arith.index_cast %3 : i32 to index
      %15 = memref.load %arg1[%14] : memref<4xi32, #tpu.memory_space<smem>>
      %c0_i32_13 = arith.constant 0 : i32
      %c0_i32_14 = arith.constant 0 : i32
      %16 = tpu.memref_slice %arg2[%c0_i32_13, %15, %c0_i32_14] : memref<2x4x256xf32, #tpu.memory_space<any>> -> memref<2x1x256xf32, #tpu.memory_space<any>>
      %c0_i32_15 = arith.constant 0 : i32
      %c0_i32_16 = arith.constant 0 : i32
      %17 = tpu.memref_slice %arg3[%c0_i32_15, %3, %c0_i32_16] : memref<2x4x256xf32, #tpu.memory_space<any>> -> memref<2x1x256xf32, #tpu.memory_space<any>>
      %18 = tpu.memref_slice %arg4[%13] : memref<4x!tpu.dma_semaphore, #tpu.memory_space<semaphore_mem>> -> memref<1x!tpu.dma_semaphore, #tpu.memory_space<semaphore_mem>>
      %19 = tpu.memref_squeeze %18 : memref<1x!tpu.dma_semaphore, #tpu.memory_space<semaphore_mem>> -> memref<!tpu.dma_semaphore, #tpu.memory_space<semaphore_mem>>
      tpu.wait_dma2 semaphore(%19 : memref<!tpu.dma_semaphore, #tpu.memory_space<semaphore_mem>>) src(%16 : memref<2x1x256xf32, #tpu.memory_space<any>>) dst(%17 : memref<2x1x256xf32, #tpu.memory_space<any>>)
    }
    %c4_i32_4 = arith.constant 4 : i32
    return
  }
}

</mosaic_0001>

<llo_original>
// kernel: tpu_custom_call.1
$region0: #{tpu_custom_call.1}
  #allocation0 [shape = 'u32[]', space=smem, size = 0x4, offset = 0x4, fixed_abs, tag = 'smem constant byte address 0x4 - core index']
  #allocation1 [shape = 'u32[144,128]{1,0:T(1,128)}', space=vmem, size = 0x12000, scoped, tag = 'internal scratch']
  #allocation2 [shape = 's32[4]{0}', space=sflag, size = 0x10, scoped, tag = 'scratch operand']
  #allocation3 [shape = 's32[1]{0}', space=sflag, size = 0x4, scoped, tag = 'scoped memory for tpu_custom_call.1']
  #allocation4 [shape = 'u8[512]{0}', space=smem, size = 0x200, scoped, tag = 'prefetched SMEM operand 0']
  #allocation5 [shape = 's32[]', space=sflag, size = 0x4, offset = 0, fixed_abs, tag = 'sflag constant byte address 0x0 - dummy sync flag']
  %s0 = inlined_call_operand.hbm [shape: s32[4], index: 0, kind: input, shape index: {}]
  %s1 = inlined_call_operand.hbm [shape: f32[2,4,256], index: 1, kind: input, shape index: {}]
  %s2 = inlined_call_operand.hbm [shape: f32[2,4,256], index: 2, kind: output, shape index: {}]
  %s3 = sld [smem:[#allocation0]]
  $region20: #{tpu_custom_call.1} parent=0
    _
  %s5 = ssub.s32 1, %s3
  %s6 = scalar_select 0, %s5, %s3
  %8 = dma.hbm_to_smem %s0, 16, [#allocation4], [#allocation3]
  %9 = dma.done [#allocation3], 16
  %10 = sfence
  loop: start=0, step=1, limit=4
  $region2: #{tpu_custom_call.1} parent=0 // loop_pre_header
    _
  $region3: #{tpu_custom_call.1} parent=0 // loop_header
    %s12 = sphi 0, %s16
    %p13 = scmp.ge.s32.totalorder %s12, 4
  $region4: #{tpu_custom_call.1} parent=0 // loop_header_branch
    %15 = sbr.rel (%p13) target = $region8
  $region5: #{tpu_custom_call.1} parent=0 // loop_body
    #allocation6 [shape = 'u32[3]{0}', space=smem, size = 0xc, scoped, tag = 'DMA stride descriptor']
    %p17 = scmp.lt.s32.totalorder %s12, 0
    %s18 = ssub.s32 0, %s12
    %s19 = scalar_select %p17, %s18, %s12
    %s20 = sand.u32 %s19, 3
    %s21 = ssub.s32 0, %s20
    %s22 = scalar_select %p17, %s21, %s20
    %p23 = scmp.ne.s32.totalorder %s22, 0
    %p24 = scmp.lt.s32.totalorder %s22, 0
    %p25 = pnand %p24, %p23
    %p26 = pneg %p25
    %s27 = sadd.s32 %s22, 4
    %s28 = scalar_select %p26, %s27, %s22
    %p29 = scmp.ge.s32.totalorder %s12, 4
    // Predicated region
    $region9: #{tpu_custom_call.1} parent=5 // pred_check
      %p30 = pneg %p29
    $region10: #{tpu_custom_call.1} parent=5 // pred_check_branch
      %32 = sbr.rel (%p30) target = $region12
    $region11: #{tpu_custom_call.1} parent=5 // pred_region
      %s33 = ssub.s32 %s12, 4
      %s34 = sld [smem:[#allocation4 + %s33]]
      %s35 = scalar_lea.sflag [#allocation2], %s28
      %s36 = smul.u32 2, 1
      %s37 = smul.u32 %s36, 2
      %s38 = sshll.u32 %s37, 4
      %39 = dma.done %s35, %s38
    $region12: #{tpu_custom_call.1} parent=5 // pred_fallthru
      _
    %s40 = sld [smem:[#allocation4 + %s12]]
    %s41 = sshrl.u32 %s40, 2
    %s42 = sand.u32 %s40, 3
    %s43 = smul.u32 %s41, 8
    %s44 = sadd.s32 %s42, %s43
    %s45 = smul.addr %s44, 16
    %s46 = scalar_lea.hbm %s1, %s45
    %s47 = sshrl.u32 %s12, 2
    %s48 = sand.u32 %s12, 3
    %s49 = smul.u32 %s47, 8
    %s50 = sadd.s32 %s48, %s49
    %s51 = smul.addr %s50, 16
    %s52 = scalar_lea.hbm %s2, %s51
    %s53 = scalar_lea.sflag [#allocation2], %s28
    %s55 = sshll.u32 1, 14
    %s56 = sxor.u32 4294967295, %s55
    %60 = sst [smem:[#allocation6]] 64
    %s61 = scalar_lea.smem [#allocation6], 1
    %62 = sst [smem:[%s61]] 64
    %s63 = scalar_lea.smem [#allocation6], 2
    %64 = sst [smem:[%s63]] 1
    %66 = dma.general %s46, 64, %s52, %s53, 131072, [#allocation6], 0, 0
  $region6: #{tpu_custom_call.1} parent=0 // loop_footer
    %s16 = sadd.s32 1, %s12
  $region7: #{tpu_custom_call.1} parent=0 // loop_footer_branch
    %11 = sbr.rel target = $region3
  $region8: #{tpu_custom_call.1} parent=0 // loop_exit
    _
  loop: start=0, step=1, limit=4
  $region13: #{tpu_custom_call.1} parent=0 // loop_pre_header
    _
  $region14: #{tpu_custom_call.1} parent=0 // loop_header
    %s68 = sphi 0, %s72
    %p69 = scmp.ge.s32.totalorder %s68, 4
  $region15: #{tpu_custom_call.1} parent=0 // loop_header_branch
    %71 = sbr.rel (%p69) target = $region19
  $region16: #{tpu_custom_call.1} parent=0 // loop_body
    %p73 = scmp.lt.s32.totalorder %s68, 0
    %s74 = ssub.s32 0, %s68
    %s75 = scalar_select %p73, %s74, %s68
    %s76 = sand.u32 %s75, 3
    %s77 = ssub.s32 0, %s76
    %s78 = scalar_select %p73, %s77, %s76
    %p79 = scmp.ne.s32.totalorder %s78, 0
    %p80 = scmp.lt.s32.totalorder %s78, 0
    %p81 = pnand %p80, %p79
    %p82 = pneg %p81
    %s83 = sadd.s32 %s78, 4
    %s84 = scalar_select %p82, %s83, %s78
    %s85 = sld [smem:[#allocation4 + %s68]]
    %s86 = scalar_lea.sflag [#allocation2], %s84
    %s87 = smul.u32 2, 1
    %s88 = smul.u32 %s87, 2
    %s89 = sshll.u32 %s88, 4
    %90 = dma.done %s86, %s89
  $region17: #{tpu_custom_call.1} parent=0 // loop_footer
    %s72 = sadd.s32 1, %s68
  $region18: #{tpu_custom_call.1} parent=0 // loop_footer_branch
    %67 = sbr.rel target = $region14
  $region19: #{tpu_custom_call.1} parent=0 // loop_exit
    _
  %91 = vsyncmov [#allocation2]
  %s92 = vpop.sfrf %91
  %p93 = scmp.eq.s32.totalorder %s92, 0
  %p94 = pneg %p93
  %96 = shalt.err (%p94)
  %s97 = scalar_lea.sflag [#allocation2], 1
  %98 = vsyncmov %s97
  %s99 = vpop.sfrf %98
  %p100 = scmp.eq.s32.totalorder %s99, 0
  %p101 = pneg %p100
  %103 = shalt.err (%p101)
  %s104 = scalar_lea.sflag [#allocation2], 2
  %105 = vsyncmov %s104
  %s106 = vpop.sfrf %105
  %p107 = scmp.eq.s32.totalorder %s106, 0
  %p108 = pneg %p107
  %110 = shalt.err (%p108)
  %s111 = scalar_lea.sflag [#allocation2], 3
  %112 = vsyncmov %s111
  %s113 = vpop.sfrf %112
  %p114 = scmp.eq.s32.totalorder %s113, 0
  %p115 = pneg %p114
  %117 = shalt.err (%p115)

</llo_original>
